<compile_context>
chip_gen: v6e
topology: v6e:2x2x1
jax: 0.10.0
libtpu: 0.0.40
codegen_flags: <defaults>
</compile_context>

<pallas_src>
import numpy as np
import jax
import jax.numpy as jnp
from jax.experimental import pallas as pl
from jax.experimental.pallas import tpu as pltpu

ROT_PARAM_NUM = {'affine': 9, 'se3euler': 3, 'se3aa': 3, 'se3spquat': 3, 'se3quat': 4}
_EPS = 1e-12


def _round_up(x, m):
    return ((x + m - 1) // m) * m


# --------------------------------------------------------------------------
# Pallas kernel: (rpn, TILE_N) rotation params -> (9, TILE_N) rotation matrix
# (row-major 3x3 flattened along sublanes, samples along lanes).
# --------------------------------------------------------------------------
def _make_rot_kernel(transform_type):

    def kernel(rp_ref, rot_ref):
        def rp(c):  # (1, TILE_N) lane-dense row, computed in f32
            return rp_ref[c:c + 1, :].astype(jnp.float32)

        if transform_type == 'se3euler':
            # R = Rz(tz) @ Ry(ty) @ Rx(tx) with torch's sign convention:
            #   Rx = [[1,0,0],[0,cx,sx],[0,-sx,cx]]
            #   Ry = [[cy,0,-sy],[0,1,0],[sy,0,cy]]
            #   Rz = [[cz,sz,0],[-sz,cz,0],[0,0,1]]
            cx, sx = jnp.cos(rp(0)), jnp.sin(rp(0))
            cy, sy = jnp.cos(rp(1)), jnp.sin(rp(1))
            cz, sz = jnp.cos(rp(2)), jnp.sin(rp(2))
            czsy = cz * sy
            szsy = sz * sy
            cols = [
                cz * cy, sz * cx + czsy * sx, sz * sx - czsy * cx,
                -sz * cy, cz * cx - szsy * sx, cz * sx + szsy * cx,
                sy, -cy * sx, cy * cx,
            ]

        elif transform_type == 'se3aa':
            # Rodrigues:  R = I + S*K + C*K^2
            ax, ay, az = rp(0), rp(1), rp(2)
            x2, y2, z2 = ax * ax, ay * ay, az * az
            angle2 = x2 + y2 + z2
            small = angle2 < _EPS
            safe_a2 = jnp.where(small, 1.0, angle2)
            angle = jnp.sqrt(safe_a2)
            S = jnp.where(small, 1.0, jnp.sin(angle) / angle)
            C = jnp.where(small, 0.0, (1.0 - jnp.cos(angle)) / safe_a2)
            Sx, Sy, Sz = S * ax, S * ay, S * az
            Cxy, Cxz, Cyz = C * ax * ay, C * ax * az, C * ay * az
            cols = [
                1.0 - C * (y2 + z2), Cxy - Sz, Sy + Cxz,
                Sz + Cxy, 1.0 - C * (x2 + z2), Cyz - Sx,
                Cxz - Sy, Sx + Cyz, 1.0 - C * (x2 + y2),
            ]

        elif transform_type in ('se3quat', 'se3spquat'):
            if transform_type == 'se3quat':
                qx, qy, qz, qw = rp(0), rp(1), rp(2), rp(3)
                norm = jnp.sqrt(qx * qx + qy * qy + qz * qz + qw * qw)
                inv = 1.0 / jnp.maximum(norm, _EPS)      # F.normalize semantics
                qx, qy, qz, qw = qx * inv, qy * inv, qz * inv, qw * inv
            else:  # stereographic projection -> unit quaternion
                sx_, sy_, sz_ = rp(0), rp(1), rp(2)
                alpha2 = sx_ * sx_ + sy_ * sy_ + sz_ * sz_
                inv = 1.0 / (1.0 + alpha2)
                qx, qy, qz = 2.0 * sx_ * inv, 2.0 * sy_ * inv, 2.0 * sz_ * inv
                qw = (1.0 - alpha2) * inv
            x2, y2, z2, w2 = qx * qx, qy * qy, qz * qz, qw * qw
            xy, xz, yz = qx * qy, qx * qz, qy * qz
            wx, wy, wz = qw * qx, qw * qy, qw * qz
            cols = [
                w2 + x2 - y2 - z2, 2.0 * (xy - wz), 2.0 * (xz + wy),
                2.0 * (xy + wz), w2 - x2 + y2 - z2, 2.0 * (yz - wx),
                2.0 * (xz - wy), 2.0 * (yz + wx), w2 - x2 - y2 + z2,
            ]
        else:
            raise ValueError(transform_type)

        # Single coalesced (9, TILE_N) store — unmasked, full-lane-width.
        rot_ref[...] = jnp.concatenate(cols, axis=0).astype(rot_ref.dtype)

    return kernel


def _rot_pallas(rot_params, transform_type, *, max_tile_n=2048):
    """rot_params: (B, K, rpn)  ->  rotation matrices (B, K, 3, 3)."""
    B, K, rpn = rot_params.shape
    N = B * K
    dtype = rot_params.dtype

    # Lane-dense layout: N (samples) on the lane axis.
    rpT = jnp.transpose(rot_params.reshape(N, rpn))          # (rpn, N)

    tile_n = min(max_tile_n, _round_up(N, 128))               # multiple of 128
    N_pad = _round_up(N, tile_n)
    if N_pad != N:
        rpT = jnp.pad(rpT, ((0, 0), (0, N_pad - N)))           # zero-pad tail

    rot9 = pl.pallas_call(
        _make_rot_kernel(transform_type),
        grid=(N_pad // tile_n,),
        in_specs=[pl.BlockSpec((rpn, tile_n), lambda i: (0, i))],
        out_specs=pl.BlockSpec((9, tile_n), lambda i: (0, i)),
        out_shape=jax.ShapeDtypeStruct((9, N_pad), dtype),
        compiler_params=pltpu.CompilerParams(
            dimension_semantics=("parallel",)),
    )(rpT)                                                     # (9, N_pad)

    return jnp.transpose(rot9[:, :N]).reshape(B, K, 3, 3)


# --------------------------------------------------------------------------
# Module wrapper (mirrors torch SE3.forward)
# --------------------------------------------------------------------------
class SE3:
    def __init__(self, transform_type='affine', has_pivot=False):
        self.transform_type = transform_type
        self.rot_param_num = ROT_PARAM_NUM[transform_type]
        self.has_pivot = has_pivot
        self.num_param = self.rot_param_num + 3 + (3 if has_pivot else 0)

    def __call__(self, x):
        B, K, L = x.shape
        if L != self.num_param:
            raise ValueError('Dimension Error!')
        rpn = self.rot_param_num

        # Pass-through outputs stay in plain XLA (fuse into downstream ops;
        # no extra HBM writes from the kernel).
        trans = x[:, :, 0:3]
        pivot = x[:, :, 3 + rpn:6 + rpn] if self.has_pivot else None

        if self.transform_type == 'affine':
            # torch: rot_params.view(B, K, 3, 3) — a pure view, no compute.
            rot = x[:, :, 3:3 + rpn].reshape(B, K, 3, 3)
        else:
            rot = _rot_pallas(x[:, :, 3:3 + rpn], self.transform_type)

        if self.has_pivot:
            return trans, rot, pivot
        return trans, rot


# --------------------------------------------------------------------------
# Pure NumPy reference (mirrors the PyTorch code path) for verification
# --------------------------------------------------------------------------
def _ref_rot_from_unitquat(q):
    x, y, z, w = q[:, 0], q[:, 1], q[:, 2], q[:, 3]
    x2, y2, z2, w2 = x * x, y * y, z * z, w * w
    R = np.zeros((q.shape[0], 3, 3))
    R[:, 0, 0] = w2 + x2 - y2 - z2
    R[:, 0, 1] = 2 * (x * y - w * z)
    R[:, 0, 2] = 2 * (x * z + w * y)
    R[:, 1, 0] = 2 * (x * y + w * z)
    R[:, 1, 1] = w2 - x2 + y2 - z2
    R[:, 1, 2] = 2 * (y * z - w * x)
    R[:, 2, 0] = 2 * (x * z - w * y)
    R[:, 2, 1] = 2 * (y * z + w * x)
    R[:, 2, 2] = w2 - x2 - y2 + z2
    return R


def _ref_forward(x, transform_type, has_pivot):
    x = np.asarray(x, dtype=np.float64)
    B, K, L = x.shape
    rpn = ROT_PARAM_NUM[transform_type]
    N = B * K
    trans = x[:, :, 0:3]
    rp = x[:, :, 3:3 + rpn].reshape(N, rpn)

    if transform_type == 'affine':
        rot = rp.reshape(B, K, 3, 3)
    elif transform_type == 'se3euler':
        def eye(): return np.tile(np.eye(3), (N, 1, 1))
        cx, sx = np.cos(rp[:, 0]), np.sin(rp[:, 0])
        cy, sy = np.cos(rp[:, 1]), np.sin(rp[:, 1])
        cz, sz = np.cos(rp[:, 2]), np.sin(rp[:, 2])
        Rx = eye(); Rx[:, 1, 1] = cx; Rx[:, 2, 2] = cx; Rx[:, 1, 2] = sx; Rx[:, 2, 1] = -sx
        Ry = eye(); Ry[:, 0, 0] = cy; Ry[:, 2, 2] = cy; Ry[:, 2, 0] = sy; Ry[:, 0, 2] = -sy
        Rz = eye(); Rz[:, 0, 0] = cz; Rz[:, 1, 1] = cz; Rz[:, 0, 1] = sz; Rz[:, 1, 0] = -sz
        rot = np.matmul(np.matmul(Rz, Ry), Rx).reshape(B, K, 3, 3)
    elif transform_type == 'se3aa':
        axis = rp
        angle2 = (axis * axis).sum(1)
        small = angle2 < _EPS
        angle = np.sqrt(np.where(small, 1.0, angle2))
        Kmat = np.zeros((N, 3, 3))
        Kmat[:, 0, 1] = -axis[:, 2]; Kmat[:, 1, 0] = axis[:, 2]
        Kmat[:, 0, 2] = axis[:, 1];  Kmat[:, 2, 0] = -axis[:, 1]
        Kmat[:, 1, 2] = -axis[:, 0]; Kmat[:, 2, 1] = axis[:, 0]
        K2 = np.matmul(Kmat, Kmat)
        S = np.where(small, 1.0, np.sin(angle) / angle)
        C = np.where(small, 0.0, (1 - np.cos(angle)) / np.where(small, 1.0, angle2))
        rot = (np.tile(np.eye(3), (N, 1, 1)) + Kmat * S[:, None, None]
               + K2 * C[:, None, None]).reshape(B, K, 3, 3)
    elif transform_type == 'se3quat':
        norm = np.sqrt((rp * rp).sum(1, keepdims=True))
        q = rp / np.maximum(norm, _EPS)
        rot = _ref_rot_from_unitquat(q).reshape(B, K, 3, 3)
    elif transform_type == 'se3spquat':
        alpha2 = (rp * rp).sum(1)
        q = np.zeros((N, 4))
        q[:, 0] = 2 * rp[:, 0] / (1 + alpha2)
        q[:, 1] = 2 * rp[:, 1] / (1 + alpha2)
        q[:, 2] = 2 * rp[:, 2] / (1 + alpha2)
        q[:, 3] = (1 - alpha2) / (1 + alpha2)
        rot = _ref_rot_from_unitquat(q).reshape(B, K, 3, 3)
    else:
        raise ValueError(transform_type)

    if has_pivot:
        pivot = x[:, :, 3 + rpn:6 + rpn]
        return trans, rot, pivot
    return trans, rot


# --------------------------------------------------------------------------
if __name__ == "__main__":
    key = jax.random.PRNGKey(0)

    # (transform_type, has_pivot, B, K) — last case exercises multi-tile grid
    # + tail padding (N = 2560 > TILE_N = 2048).
    configs = [
        ('affine', False, 2, 8),       # default config (L = 12), wrapper reshape
        ('se3euler', False, 2, 8),
        ('se3aa', False, 2, 8),
        ('se3quat', True, 2, 8),
        ('se3spquat', True, 2, 8),
        ('se3euler', False, 32, 80),
    ]

    for transform_type, has_pivot, B, K in configs:
        mod = SE3(transform_type=transform_type, has_pivot=has_pivot)
        key, sub = jax.random.split(key)
        x = jax.random.normal(sub, (B, K, mod.num_param), dtype=jnp.float32)

        outs = mod(x)
        outs = jax.block_until_ready(outs)

        refs = _ref_forward(np.asarray(x), transform_type, has_pivot)
        for got, ref in zip(outs, refs):
            np.testing.assert_allclose(np.asarray(got), ref, rtol=1e-4, atol=1e-5)

    print("KERNEL_OK")
</pallas_src>

<mosaic_0001>
module attributes {stable_mosaic.version = 11 : i64} {
  func.func @kernel(%arg0: i32, %arg1: memref<3x128xf32, #tpu.memory_space<vmem>>, %arg2: memref<9x128xf32, #tpu.memory_space<vmem>>) attributes {dimension_semantics = [#tpu.dimension_semantics<parallel>], iteration_bounds = array<i64: 1>, scalar_prefetch = 0 : i64, scratch_operands = 0 : i64, tpu.core_type = #tpu.core_type<tc>, window_params = [{transform_indices = @transform_0, window_bounds = array<i64: 3, 128>}, {transform_indices = @transform_1, window_bounds = array<i64: 9, 128>}]} {
    %c0 = arith.constant 0 : index
    %c0_0 = arith.constant 0 : index
    %0 = vector.load %arg1[%c0, %c0_0] : memref<3x128xf32, #tpu.memory_space<vmem>>, vector<1x128xf32>
    %1 = math.cos %0 : vector<1x128xf32>
    %c0_1 = arith.constant 0 : index
    %c0_2 = arith.constant 0 : index
    %2 = vector.load %arg1[%c0_1, %c0_2] : memref<3x128xf32, #tpu.memory_space<vmem>>, vector<1x128xf32>
    %3 = math.sin %2 : vector<1x128xf32>
    %c1 = arith.constant 1 : index
    %c0_3 = arith.constant 0 : index
    %4 = vector.load %arg1[%c1, %c0_3] : memref<3x128xf32, #tpu.memory_space<vmem>>, vector<1x128xf32>
    %5 = math.cos %4 : vector<1x128xf32>
    %c1_4 = arith.constant 1 : index
    %c0_5 = arith.constant 0 : index
    %6 = vector.load %arg1[%c1_4, %c0_5] : memref<3x128xf32, #tpu.memory_space<vmem>>, vector<1x128xf32>
    %7 = math.sin %6 : vector<1x128xf32>
    %c2 = arith.constant 2 : index
    %c0_6 = arith.constant 0 : index
    %8 = vector.load %arg1[%c2, %c0_6] : memref<3x128xf32, #tpu.memory_space<vmem>>, vector<1x128xf32>
    %9 = math.cos %8 : vector<1x128xf32>
    %c2_7 = arith.constant 2 : index
    %c0_8 = arith.constant 0 : index
    %10 = vector.load %arg1[%c2_7, %c0_8] : memref<3x128xf32, #tpu.memory_space<vmem>>, vector<1x128xf32>
    %11 = math.sin %10 : vector<1x128xf32>
    %12 = arith.mulf %9, %7 : vector<1x128xf32>
    %13 = arith.mulf %11, %7 : vector<1x128xf32>
    %14 = arith.mulf %9, %5 : vector<1x128xf32>
    %15 = arith.mulf %11, %1 : vector<1x128xf32>
    %16 = arith.mulf %12, %3 : vector<1x128xf32>
    %17 = arith.addf %15, %16 : vector<1x128xf32>
    %18 = arith.mulf %11, %3 : vector<1x128xf32>
    %19 = arith.mulf %12, %1 : vector<1x128xf32>
    %20 = arith.subf %18, %19 : vector<1x128xf32>
    %cst = arith.constant 0.000000e+00 : f32
    %21 = vector.broadcast %cst : f32 to vector<1x128xf32>
    %22 = arith.subf %21, %11 : vector<1x128xf32>
    %23 = arith.mulf %22, %5 : vector<1x128xf32>
    %24 = arith.mulf %9, %1 : vector<1x128xf32>
    %25 = arith.mulf %13, %3 : vector<1x128xf32>
    %26 = arith.subf %24, %25 : vector<1x128xf32>
    %27 = arith.mulf %9, %3 : vector<1x128xf32>
    %28 = arith.mulf %13, %1 : vector<1x128xf32>
    %29 = arith.addf %27, %28 : vector<1x128xf32>
    %cst_9 = arith.constant 0.000000e+00 : f32
    %30 = vector.broadcast %cst_9 : f32 to vector<1x128xf32>
    %31 = arith.subf %30, %5 : vector<1x128xf32>
    %32 = arith.mulf %31, %3 : vector<1x128xf32>
    %33 = arith.mulf %5, %1 : vector<1x128xf32>
    %34 = tpu.concatenate %14, %17, %20, %23, %26, %29, %7, %32, %33 in 0 : vector<1x128xf32>, vector<1x128xf32>, vector<1x128xf32>, vector<1x128xf32>, vector<1x128xf32>, vector<1x128xf32>, vector<1x128xf32>, vector<1x128xf32>, vector<1x128xf32> -> vector<9x128xf32>
    %c0_10 = arith.constant 0 : index
    %c0_11 = arith.constant 0 : index
    %35 = vector.load %arg2[%c0_10, %c0_11] : memref<9x128xf32, #tpu.memory_space<vmem>>, vector<9x128xf32>
    tpu.vector_store %arg2[%c0_10, %c0_11], %34 {strides = array<i32>} : memref<9x128xf32, #tpu.memory_space<vmem>>, vector<9x128xf32>,
    return
  }
  func.func @transform_0(%arg0: i32) -> (i32, i32) {
    %c0_i32 = arith.constant 0 : i32
    %c0_i32_0 = arith.constant 0 : i32
    return %c0_i32, %arg0 : i32, i32
  }
  func.func @transform_1(%arg0: i32) -> (i32, i32) {
    %c0_i32 = arith.constant 0 : i32
    %c0_i32_0 = arith.constant 0 : i32
    return %c0_i32, %arg0 : i32, i32
  }
}

</mosaic_0001>

<llo_original>
// kernel: tpu_custom_call.1
$region0: #{tpu_custom_call.1}
  #allocation0 [shape = 'u32[]', space=smem, size = 0x4, offset = 0x4, fixed_abs, tag = 'smem constant byte address 0x4 - core index']
  #allocation1 [shape = 'u32[144,128]{1,0:T(1,128)}', space=vmem, size = 0x12000, scoped, tag = 'internal scratch']
  %s0 = inlined_call_operand.hbm [shape: f32[3,128], index: 0, kind: input, shape index: {}]
  %s1 = inlined_call_operand.hbm [shape: f32[9,128], index: 1, kind: output, shape index: {}]
  %s2 = sld [smem:[#allocation0]]
  $region18: #{tpu_custom_call.1} parent=0
    _
  %s4 = ssub.s32 1, %s2
  %s5 = scalar_select 0, %s4, %s2
  $region1: #{tpu_custom_call.1} parent=0
    #allocation2 [shape = 'u8[2048]{0}', space=vmem, size = 0x800, scoped, tag = 'input window, operand 0, single buffered']
    #allocation3 [shape = 's32[1]{0}', space=sflag, size = 0x4, scoped, tag = 'scoped memory for tpu_custom_call.1']
    #allocation4 [shape = 's32[1]{0}', space=sflag, size = 0x4, scoped, tag = 'scoped memory for tpu_custom_call.1']
    #allocation5 [shape = 'u8[8192]{0}', space=vmem, size = 0x2000, scoped, tag = 'output window, operand 0, single buffered']
    %6 = vsyncpa [#allocation3], 0
    %7 = vsyncpa [#allocation4], 0
    // Predicated region
    $region2: #{tpu_custom_call.1} parent=1 // pred_check
      _
    $region3: #{tpu_custom_call.1} parent=1 // pred_check_branch
      %9 = sbr.rel (0) target = $region5
    $region4: #{tpu_custom_call.1} parent=1 // pred_region
      %s11 = ssub.s32 64, 64
      %12 = vsyncadd [#allocation3], %s11
      %s14 = sshll.u32 [#allocation2], 4
      %s15 = int_to_ptr.vmem [resolvable:$true] %s14
      %17 = dma.hbm_to_vmem [thread:$0]  %s0, 64, %s15, [#allocation3]
    $region5: #{tpu_custom_call.1} parent=1 // pred_fallthru
      _
    // Predicated region
    $region6: #{tpu_custom_call.1} parent=1 // pred_check
      _
    $region7: #{tpu_custom_call.1} parent=1 // pred_check_branch
      %19 = sbr.rel (0) target = $region9
    $region8: #{tpu_custom_call.1} parent=1 // pred_region
      %20 = dma.done [#allocation3], 64
    $region9: #{tpu_custom_call.1} parent=1 // pred_fallthru
      _
    %v21 = vld [vmem:[#allocation2] sm:$0x1]
    %v22 = vand.u32 2147483647, %v21
    %vm23 = vcmp.le.f32.partialorder %v22, 0.7853982
    %vm24 = vcmp.lt.s32.totalorder %v21, 0
    %v25 = vand.u32 %v21, 2139095040
    %v26 = vshrl.u32 %v25, 23
    %v27 = vsub.s32 %v26, 127
    %v28 = vand.u32 2147483647, %v21
    %v29 = vand.u32 %v28, 8388607
    %v30 = vor.u32 %v29, 8388608
    %v31 = vsub.s32 0, %v30
    %v32 = vadd.s32 %v27, 1
    %vm33 = vcmp.gt.s32.totalorder %v32, 0
    %v34 = vsel %vm33, %v32, 0
    %v35 = vshrl.u32 %v34, 5
    %v36 = vand.u32 %v34, 31
    %v37 = vsub.s32 32, %v36
    %v38 = vshrl.u32 683565275, %v37
    %v39 = vshll.u32 683565275, %v36
    %v40 = vshrl.u32 2475754826, %v37
    %v41 = vor.u32 %v39, %v40
    %v42 = vshll.u32 2475754826, %v36
    %v43 = vshrl.u32 2131351028, %v37
    %v44 = vor.u32 %v42, %v43
    %v45 = vshll.u32 2131351028, %v36
    %v46 = vshrl.u32 2102212464, %v37
    %v47 = vor.u32 %v45, %v46
    %v48 = vshll.u32 2102212464, %v36
    %v49 = vshrl.u32 920167782, %v37
    %v50 = vor.u32 %v48, %v49
    %v51 = vshll.u32 920167782, %v36
    %v52 = vshrl.u32 1326507024, %v37
    %v53 = vor.u32 %v51, %v52
    %vm54 = vcmp.lt.s32.totalorder %v35, 1
    %vm55 = vcmp.lt.s32.totalorder %v35, 2
    %vm56 = vcmp.lt.s32.totalorder %v35, 3
    %vm57 = vcmp.lt.s32.totalorder %v35, 4
    %v58 = vsel %vm54, %v38, %v41
    %v59 = vsel %vm57, %v47, 2102212464
    %v60 = vsel %vm56, %v44, %v59
    %v61 = vsel %vm55, %v58, %v60
    %v62 = vsel %vm54, %v41, %v44
    %v63 = vsel %vm57, %v50, 920167782
    %v64 = vsel %vm56, %v47, %v63
    %v65 = vsel %vm55, %v62, %v64
    %v66 = vsel %vm54, %v44, %v47
    %v67 = vsel %vm57, %v53, 1326507024
    %v68 = vsel %vm56, %v50, %v67
    %v69 = vsel %vm55, %v66, %v68
    %v70 = vshll.u32 %v30, 8
    %v71 = vmul.u32.u64.compose %v70, %v69
    %v72 = vextract.low.u32 %v71
    %v73 = vextract.high.u32 %v71
    %v74 = vmul.u32.u64.compose %v70, %v65
    %v75 = vextract.low.u32 %v74
    %v76 = vextract.high.u32 %v74
    %v77 = vmul.u32 %v70, %v61
    %v78 = vadd.s32 %v73, %v75
    %vm79 = vc.u32 %v73, %v75
    %v80 = vadd.s32 %v76, 1
    %v81 = vsel %vm79, %v80, %v76
    %v82 = vadd.s32 %v77, %v81
    %v83 = vadd.s32 %v82, 536870912
    %v84 = vshrl.u32 %v83, 30
    %v85 = vshll.u32 %v84, 30
    %v86 = vsub.s32 %v82, %v85
    %vm87 = vcmp.lt.s32.totalorder %v86, 0
    %v88 = vsub.s32 0, %v86
    %v89 = vsel %vm87, %v88, %v86
    %v90 = vclz %v89
    %v91 = vsub.s32 %v90, 2
    %vm92 = vcmp.gt.s32.totalorder 0, %v91
    %v93 = vsel %vm92, 0, %v91
    %v94 = vsub.s32 32, %v93
    %v95 = vshll.u32 %v86, %v93
    %v96 = vshrl.u32 %v78, %v94
    %v97 = vor.u32 %v95, %v96
    %v98 = vsub.s32 4294967266, %v93
    %v99 = vadd.s32 %v98, 127
    %v100 = vshll.u32 %v99, 23
    %v101 = vor.u32 4788187, %v100
    %v102 = vand.u32 2147483647, %v101
    %v104 = vcvt.s32.f32 %v97
    %v105 = vmul.f32 %v104, %v102
    %v106 = vxor.u32 %v105, 2147483648
    %v107 = vsel %vm24, %v106, %v105
    %v108 = vsub.s32 4, %v84
    %v109 = vsel %vm24, %v108, %v84
    %v110 = vsel %vm23, %v21, %v107
    %v111 = vsel %vm23, 0, %v109
    %v112 = vcosq.f32.pop %v110
    %v113 = vsinq.f32.pop %v110
    %vm114 = vweird.f32 %v21
    %v115 = vand.u32 %v111, 3
    %vm116 = vcmp.lt.s32.totalorder %v115, 2
    %vm117 = vcmp.eq.s32.totalorder %v115, 0
    %v118 = vxor.u32 %v113, 2147483648
    %v119 = vsel %vm117, %v112, %v118
    %vm120 = vcmp.eq.s32.totalorder %v115, 2
    %v121 = vxor.u32 %v112, 2147483648
    %v122 = vsel %vm120, %v121, %v113
    %v123 = vsel %vm116, %v119, %v122
    %v124 = vsel %vm114, nan, %v123
    %v125 = vand.u32 2147483647, %v21
    %vm126 = vcmp.le.f32.partialorder %v125, 0.7853982
    %vm127 = vcmp.lt.s32.totalorder %v21, 0
    %v128 = vand.u32 %v21, 2139095040
    %v129 = vshrl.u32 %v128, 23
    %v130 = vsub.s32 %v129, 127
    %v131 = vand.u32 2147483647, %v21
    %v132 = vand.u32 %v131, 8388607
    %v133 = vor.u32 %v132, 8388608
    %v134 = vsub.s32 0, %v133
    %v135 = vadd.s32 %v130, 1
    %vm136 = vcmp.gt.s32.totalorder %v135, 0
    %v137 = vsel %vm136, %v135, 0
    %v138 = vshrl.u32 %v137, 5
    %v139 = vand.u32 %v137, 31
    %v140 = vsub.s32 32, %v139
    %v141 = vshrl.u32 683565275, %v140
    %v142 = vshll.u32 683565275, %v139
    %v143 = vshrl.u32 2475754826, %v140
    %v144 = vor.u32 %v142, %v143
    %v145 = vshll.u32 2475754826, %v139
    %v146 = vshrl.u32 2131351028, %v140
    %v147 = vor.u32 %v145, %v146
    %v148 = vshll.u32 2131351028, %v139
    %v149 = vshrl.u32 2102212464, %v140
    %v150 = vor.u32 %v148, %v149
    %v151 = vshll.u32 2102212464, %v139
    %v152 = vshrl.u32 920167782, %v140
    %v153 = vor.u32 %v151, %v152
    %v154 = vshll.u32 920167782, %v139
    %v155 = vshrl.u32 1326507024, %v140
    %v156 = vor.u32 %v154, %v155
    %vm157 = vcmp.lt.s32.totalorder %v138, 1
    %vm158 = vcmp.lt.s32.totalorder %v138, 2
    %vm159 = vcmp.lt.s32.totalorder %v138, 3
    %vm160 = vcmp.lt.s32.totalorder %v138, 4
    %v161 = vsel %vm157, %v141, %v144
    %v162 = vsel %vm160, %v150, 2102212464
    %v163 = vsel %vm159, %v147, %v162
    %v164 = vsel %vm158, %v161, %v163
    %v165 = vsel %vm157, %v144, %v147
    %v166 = vsel %vm160, %v153, 920167782
    %v167 = vsel %vm159, %v150, %v166
    %v168 = vsel %vm158, %v165, %v167
    %v169 = vsel %vm157, %v147, %v150
    %v170 = vsel %vm160, %v156, 1326507024
    %v171 = vsel %vm159, %v153, %v170
    %v172 = vsel %vm158, %v169, %v171
    %v173 = vshll.u32 %v133, 8
    %v174 = vmul.u32.u64.compose %v173, %v172
    %v175 = vextract.low.u32 %v174
    %v176 = vextract.high.u32 %v174
    %v177 = vmul.u32.u64.compose %v173, %v168
    %v178 = vextract.low.u32 %v177
    %v179 = vextract.high.u32 %v177
    %v180 = vmul.u32 %v173, %v164
    %v181 = vadd.s32 %v176, %v178
    %vm182 = vc.u32 %v176, %v178
    %v183 = vadd.s32 %v179, 1
    %v184 = vsel %vm182, %v183, %v179
    %v185 = vadd.s32 %v180, %v184
    %v186 = vadd.s32 %v185, 536870912
    %v187 = vshrl.u32 %v186, 30
    %v188 = vshll.u32 %v187, 30
    %v189 = vsub.s32 %v185, %v188
    %vm190 = vcmp.lt.s32.totalorder %v189, 0
    %v191 = vsub.s32 0, %v189
    %v192 = vsel %vm190, %v191, %v189
    %v193 = vclz %v192
    %v194 = vsub.s32 %v193, 2
    %vm195 = vcmp.gt.s32.totalorder 0, %v194
    %v196 = vsel %vm195, 0, %v194
    %v197 = vsub.s32 32, %v196
    %v198 = vshll.u32 %v189, %v196
    %v199 = vshrl.u32 %v181, %v197
    %v200 = vor.u32 %v198, %v199
    %v201 = vsub.s32 4294967266, %v196
    %v202 = vadd.s32 %v201, 127
    %v203 = vshll.u32 %v202, 23
    %v204 = vor.u32 4788187, %v203
    %v205 = vand.u32 2147483647, %v204
    %v207 = vcvt.s32.f32 %v200
    %v208 = vmul.f32 %v207, %v205
    %v209 = vxor.u32 %v208, 2147483648
    %v210 = vsel %vm127, %v209, %v208
    %v211 = vsub.s32 4, %v187
    %v212 = vsel %vm127, %v211, %v187
    %v213 = vsel %vm126, %v21, %v210
    %v214 = vsel %vm126, 0, %v212
    %v215 = vcosq.f32.pop %v213
    %v216 = vsinq.f32.pop %v213
    %vm217 = vweird.f32 %v21
    %v218 = vadd.s32 %v214, 3
    %v219 = vand.u32 %v218, 3
    %vm220 = vcmp.lt.s32.totalorder %v219, 2
    %vm221 = vcmp.eq.s32.totalorder %v219, 0
    %v222 = vxor.u32 %v216, 2147483648
    %v223 = vsel %vm221, %v215, %v222
    %vm224 = vcmp.eq.s32.totalorder %v219, 2
    %v225 = vxor.u32 %v215, 2147483648
    %v226 = vsel %vm224, %v225, %v216
    %v227 = vsel %vm220, %v223, %v226
    %v228 = vsel %vm217, nan, %v227
    %v229 = vld [vmem:[#allocation2 + $0x1] sm:$0x1]
    %v230 = vand.u32 2147483647, %v229
    %vm231 = vcmp.le.f32.partialorder %v230, 0.7853982
    %vm232 = vcmp.lt.s32.totalorder %v229, 0
    %v233 = vand.u32 %v229, 2139095040
    %v234 = vshrl.u32 %v233, 23
    %v235 = vsub.s32 %v234, 127
    %v236 = vand.u32 2147483647, %v229
    %v237 = vand.u32 %v236, 8388607
    %v238 = vor.u32 %v237, 8388608
    %v239 = vsub.s32 0, %v238
    %v240 = vadd.s32 %v235, 1
    %vm241 = vcmp.gt.s32.totalorder %v240, 0
    %v242 = vsel %vm241, %v240, 0
    %v243 = vshrl.u32 %v242, 5
    %v244 = vand.u32 %v242, 31
    %v245 = vsub.s32 32, %v244
    %v246 = vshrl.u32 683565275, %v245
    %v247 = vshll.u32 683565275, %v244
    %v248 = vshrl.u32 2475754826, %v245
    %v249 = vor.u32 %v247, %v248
    %v250 = vshll.u32 2475754826, %v244
    %v251 = vshrl.u32 2131351028, %v245
    %v252 = vor.u32 %v250, %v251
    %v253 = vshll.u32 2131351028, %v244
    %v254 = vshrl.u32 2102212464, %v245
    %v255 = vor.u32 %v253, %v254
    %v256 = vshll.u32 2102212464, %v244
    %v257 = vshrl.u32 920167782, %v245
    %v258 = vor.u32 %v256, %v257
    %v259 = vshll.u32 920167782, %v244
    %v260 = vshrl.u32 1326507024, %v245
    %v261 = vor.u32 %v259, %v260
    %vm262 = vcmp.lt.s32.totalorder %v243, 1
    %vm263 = vcmp.lt.s32.totalorder %v243, 2
    %vm264 = vcmp.lt.s32.totalorder %v243, 3
    %vm265 = vcmp.lt.s32.totalorder %v243, 4
    %v266 = vsel %vm262, %v246, %v249
    %v267 = vsel %vm265, %v255, 2102212464
    %v268 = vsel %vm264, %v252, %v267
    %v269 = vsel %vm263, %v266, %v268
    %v270 = vsel %vm262, %v249, %v252
    %v271 = vsel %vm265, %v258, 920167782
    %v272 = vsel %vm264, %v255, %v271
    %v273 = vsel %vm263, %v270, %v272
    %v274 = vsel %vm262, %v252, %v255
    %v275 = vsel %vm265, %v261, 1326507024
    %v276 = vsel %vm264, %v258, %v275
    %v277 = vsel %vm263, %v274, %v276
    %v278 = vshll.u32 %v238, 8
    %v279 = vmul.u32.u64.compose %v278, %v277
    %v280 = vextract.low.u32 %v279
    %v281 = vextract.high.u32 %v279
    %v282 = vmul.u32.u64.compose %v278, %v273
    %v283 = vextract.low.u32 %v282
    %v284 = vextract.high.u32 %v282
    %v285 = vmul.u32 %v278, %v269
    %v286 = vadd.s32 %v281, %v283
    %vm287 = vc.u32 %v281, %v283
    %v288 = vadd.s32 %v284, 1
    %v289 = vsel %vm287, %v288, %v284
    %v290 = vadd.s32 %v285, %v289
    %v291 = vadd.s32 %v290, 536870912
    %v292 = vshrl.u32 %v291, 30
    %v293 = vshll.u32 %v292, 30
    %v294 = vsub.s32 %v290, %v293
    %vm295 = vcmp.lt.s32.totalorder %v294, 0
    %v296 = vsub.s32 0, %v294
    %v297 = vsel %vm295, %v296, %v294
    %v298 = vclz %v297
    %v299 = vsub.s32 %v298, 2
    %vm300 = vcmp.gt.s32.totalorder 0, %v299
    %v301 = vsel %vm300, 0, %v299
    %v302 = vsub.s32 32, %v301
    %v303 = vshll.u32 %v294, %v301
    %v304 = vshrl.u32 %v286, %v302
    %v305 = vor.u32 %v303, %v304
    %v306 = vsub.s32 4294967266, %v301
    %v307 = vadd.s32 %v306, 127
    %v308 = vshll.u32 %v307, 23
    %v309 = vor.u32 4788187, %v308
    %v310 = vand.u32 2147483647, %v309
    %v312 = vcvt.s32.f32 %v305
    %v313 = vmul.f32 %v312, %v310
    %v314 = vxor.u32 %v313, 2147483648
    %v315 = vsel %vm232, %v314, %v313
    %v316 = vsub.s32 4, %v292
    %v317 = vsel %vm232, %v316, %v292
    %v318 = vsel %vm231, %v229, %v315
    %v319 = vsel %vm231, 0, %v317
    %v320 = vcosq.f32.pop %v318
    %v321 = vsinq.f32.pop %v318
    %vm322 = vweird.f32 %v229
    %v323 = vand.u32 %v319, 3
    %vm324 = vcmp.lt.s32.totalorder %v323, 2
    %vm325 = vcmp.eq.s32.totalorder %v323, 0
    %v326 = vxor.u32 %v321, 2147483648
    %v327 = vsel %vm325, %v320, %v326
    %vm328 = vcmp.eq.s32.totalorder %v323, 2
    %v329 = vxor.u32 %v320, 2147483648
    %v330 = vsel %vm328, %v329, %v321
    %v331 = vsel %vm324, %v327, %v330
    %v332 = vsel %vm322, nan, %v331
    %v333 = vand.u32 2147483647, %v229
    %vm334 = vcmp.le.f32.partialorder %v333, 0.7853982
    %vm335 = vcmp.lt.s32.totalorder %v229, 0
    %v336 = vand.u32 %v229, 2139095040
    %v337 = vshrl.u32 %v336, 23
    %v338 = vsub.s32 %v337, 127
    %v339 = vand.u32 2147483647, %v229
    %v340 = vand.u32 %v339, 8388607
    %v341 = vor.u32 %v340, 8388608
    %v342 = vsub.s32 0, %v341
    %v343 = vadd.s32 %v338, 1
    %vm344 = vcmp.gt.s32.totalorder %v343, 0
    %v345 = vsel %vm344, %v343, 0
    %v346 = vshrl.u32 %v345, 5
    %v347 = vand.u32 %v345, 31
    %v348 = vsub.s32 32, %v347
    %v349 = vshrl.u32 683565275, %v348
    %v350 = vshll.u32 683565275, %v347
    %v351 = vshrl.u32 2475754826, %v348
    %v352 = vor.u32 %v350, %v351
    %v353 = vshll.u32 2475754826, %v347
    %v354 = vshrl.u32 2131351028, %v348
    %v355 = vor.u32 %v353, %v354
    %v356 = vshll.u32 2131351028, %v347
    %v357 = vshrl.u32 2102212464, %v348
    %v358 = vor.u32 %v356, %v357
    %v359 = vshll.u32 2102212464, %v347
    %v360 = vshrl.u32 920167782, %v348
    %v361 = vor.u32 %v359, %v360
    %v362 = vshll.u32 920167782, %v347
    %v363 = vshrl.u32 1326507024, %v348
    %v364 = vor.u32 %v362, %v363
    %vm365 = vcmp.lt.s32.totalorder %v346, 1
    %vm366 = vcmp.lt.s32.totalorder %v346, 2
    %vm367 = vcmp.lt.s32.totalorder %v346, 3
    %vm368 = vcmp.lt.s32.totalorder %v346, 4
    %v369 = vsel %vm365, %v349, %v352
    %v370 = vsel %vm368, %v358, 2102212464
    %v371 = vsel %vm367, %v355, %v370
    %v372 = vsel %vm366, %v369, %v371
    %v373 = vsel %vm365, %v352, %v355
    %v374 = vsel %vm368, %v361, 920167782
    %v375 = vsel %vm367, %v358, %v374
    %v376 = vsel %vm366, %v373, %v375
    %v377 = vsel %vm365, %v355, %v358
    %v378 = vsel %vm368, %v364, 1326507024
    %v379 = vsel %vm367, %v361, %v378
    %v380 = vsel %vm366, %v377, %v379
    %v381 = vshll.u32 %v341, 8
    %v382 = vmul.u32.u64.compose %v381, %v380
    %v383 = vextract.low.u32 %v382
    %v384 = vextract.high.u32 %v382
    %v385 = vmul.u32.u64.compose %v381, %v376
    %v386 = vextract.low.u32 %v385
    %v387 = vextract.high.u32 %v385
    %v388 = vmul.u32 %v381, %v372
    %v389 = vadd.s32 %v384, %v386
    %vm390 = vc.u32 %v384, %v386
    %v391 = vadd.s32 %v387, 1
    %v392 = vsel %vm390, %v391, %v387
    %v393 = vadd.s32 %v388, %v392
    %v394 = vadd.s32 %v393, 536870912
    %v395 = vshrl.u32 %v394, 30
    %v396 = vshll.u32 %v395, 30
    %v397 = vsub.s32 %v393, %v396
    %vm398 = vcmp.lt.s32.totalorder %v397, 0
    %v399 = vsub.s32 0, %v397
    %v400 = vsel %vm398, %v399, %v397
    %v401 = vclz %v400
    %v402 = vsub.s32 %v401, 2
    %vm403 = vcmp.gt.s32.totalorder 0, %v402
    %v404 = vsel %vm403, 0, %v402
    %v405 = vsub.s32 32, %v404
    %v406 = vshll.u32 %v397, %v404
    %v407 = vshrl.u32 %v389, %v405
    %v408 = vor.u32 %v406, %v407
    %v409 = vsub.s32 4294967266, %v404
    %v410 = vadd.s32 %v409, 127
    %v411 = vshll.u32 %v410, 23
    %v412 = vor.u32 4788187, %v411
    %v413 = vand.u32 2147483647, %v412
    %v415 = vcvt.s32.f32 %v408
    %v416 = vmul.f32 %v415, %v413
    %v417 = vxor.u32 %v416, 2147483648
    %v418 = vsel %vm335, %v417, %v416
    %v419 = vsub.s32 4, %v395
    %v420 = vsel %vm335, %v419, %v395
    %v421 = vsel %vm334, %v229, %v418
    %v422 = vsel %vm334, 0, %v420
    %v423 = vcosq.f32.pop %v421
    %v424 = vsinq.f32.pop %v421
    %vm425 = vweird.f32 %v229
    %v426 = vadd.s32 %v422, 3
    %v427 = vand.u32 %v426, 3
    %vm428 = vcmp.lt.s32.totalorder %v427, 2
    %vm429 = vcmp.eq.s32.totalorder %v427, 0
    %v430 = vxor.u32 %v424, 2147483648
    %v431 = vsel %vm429, %v423, %v430
    %vm432 = vcmp.eq.s32.totalorder %v427, 2
    %v433 = vxor.u32 %v423, 2147483648
    %v434 = vsel %vm432, %v433, %v424
    %v435 = vsel %vm428, %v431, %v434
    %v436 = vsel %vm425, nan, %v435
    %v437 = vld [vmem:[#allocation2 + $0x2] sm:$0x1]
    %v438 = vand.u32 2147483647, %v437
    %vm439 = vcmp.le.f32.partialorder %v438, 0.7853982
    %vm440 = vcmp.lt.s32.totalorder %v437, 0
    %v441 = vand.u32 %v437, 2139095040
    %v442 = vshrl.u32 %v441, 23
    %v443 = vsub.s32 %v442, 127
    %v444 = vand.u32 2147483647, %v437
    %v445 = vand.u32 %v444, 8388607
    %v446 = vor.u32 %v445, 8388608
    %v447 = vsub.s32 0, %v446
    %v448 = vadd.s32 %v443, 1
    %vm449 = vcmp.gt.s32.totalorder %v448, 0
    %v450 = vsel %vm449, %v448, 0
    %v451 = vshrl.u32 %v450, 5
    %v452 = vand.u32 %v450, 31
    %v453 = vsub.s32 32, %v452
    %v454 = vshrl.u32 683565275, %v453
    %v455 = vshll.u32 683565275, %v452
    %v456 = vshrl.u32 2475754826, %v453
    %v457 = vor.u32 %v455, %v456
    %v458 = vshll.u32 2475754826, %v452
    %v459 = vshrl.u32 2131351028, %v453
    %v460 = vor.u32 %v458, %v459
    %v461 = vshll.u32 2131351028, %v452
    %v462 = vshrl.u32 2102212464, %v453
    %v463 = vor.u32 %v461, %v462
    %v464 = vshll.u32 2102212464, %v452
    %v465 = vshrl.u32 920167782, %v453
    %v466 = vor.u32 %v464, %v465
    %v467 = vshll.u32 920167782, %v452
    %v468 = vshrl.u32 1326507024, %v453
    %v469 = vor.u32 %v467, %v468
    %vm470 = vcmp.lt.s32.totalorder %v451, 1
    %vm471 = vcmp.lt.s32.totalorder %v451, 2
    %vm472 = vcmp.lt.s32.totalorder %v451, 3
    %vm473 = vcmp.lt.s32.totalorder %v451, 4
    %v474 = vsel %vm470, %v454, %v457
    %v475 = vsel %vm473, %v463, 2102212464
    %v476 = vsel %vm472, %v460, %v475
    %v477 = vsel %vm471, %v474, %v476
    %v478 = vsel %vm470, %v457, %v460
    %v479 = vsel %vm473, %v466, 920167782
    %v480 = vsel %vm472, %v463, %v479
    %v481 = vsel %vm471, %v478, %v480
    %v482 = vsel %vm470, %v460, %v463
    %v483 = vsel %vm473, %v469, 1326507024
    %v484 = vsel %vm472, %v466, %v483
    %v485 = vsel %vm471, %v482, %v484
    %v486 = vshll.u32 %v446, 8
    %v487 = vmul.u32.u64.compose %v486, %v485
    %v488 = vextract.low.u32 %v487
    %v489 = vextract.high.u32 %v487
    %v490 = vmul.u32.u64.compose %v486, %v481
    %v491 = vextract.low.u32 %v490
    %v492 = vextract.high.u32 %v490
    %v493 = vmul.u32 %v486, %v477
    %v494 = vadd.s32 %v489, %v491
    %vm495 = vc.u32 %v489, %v491
    %v496 = vadd.s32 %v492, 1
    %v497 = vsel %vm495, %v496, %v492
    %v498 = vadd.s32 %v493, %v497
    %v499 = vadd.s32 %v498, 536870912
    %v500 = vshrl.u32 %v499, 30
    %v501 = vshll.u32 %v500, 30
    %v502 = vsub.s32 %v498, %v501
    %vm503 = vcmp.lt.s32.totalorder %v502, 0
    %v504 = vsub.s32 0, %v502
    %v505 = vsel %vm503, %v504, %v502
    %v506 = vclz %v505
    %v507 = vsub.s32 %v506, 2
    %vm508 = vcmp.gt.s32.totalorder 0, %v507
    %v509 = vsel %vm508, 0, %v507
    %v510 = vsub.s32 32, %v509
    %v511 = vshll.u32 %v502, %v509
    %v512 = vshrl.u32 %v494, %v510
    %v513 = vor.u32 %v511, %v512
    %v514 = vsub.s32 4294967266, %v509
    %v515 = vadd.s32 %v514, 127
    %v516 = vshll.u32 %v515, 23
    %v517 = vor.u32 4788187, %v516
    %v518 = vand.u32 2147483647, %v517
    %v520 = vcvt.s32.f32 %v513
    %v521 = vmul.f32 %v520, %v518
    %v522 = vxor.u32 %v521, 2147483648
    %v523 = vsel %vm440, %v522, %v521
    %v524 = vsub.s32 4, %v500
    %v525 = vsel %vm440, %v524, %v500
    %v526 = vsel %vm439, %v437, %v523
    %v527 = vsel %vm439, 0, %v525
    %v528 = vcosq.f32.pop %v526
    %v529 = vsinq.f32.pop %v526
    %vm530 = vweird.f32 %v437
    %v531 = vand.u32 %v527, 3
    %vm532 = vcmp.lt.s32.totalorder %v531, 2
    %vm533 = vcmp.eq.s32.totalorder %v531, 0
    %v534 = vxor.u32 %v529, 2147483648
    %v535 = vsel %vm533, %v528, %v534
    %vm536 = vcmp.eq.s32.totalorder %v531, 2
    %v537 = vxor.u32 %v528, 2147483648
    %v538 = vsel %vm536, %v537, %v529
    %v539 = vsel %vm532, %v535, %v538
    %v540 = vsel %vm530, nan, %v539
    %v541 = vand.u32 2147483647, %v437
    %vm542 = vcmp.le.f32.partialorder %v541, 0.7853982
    %vm543 = vcmp.lt.s32.totalorder %v437, 0
    %v544 = vand.u32 %v437, 2139095040
    %v545 = vshrl.u32 %v544, 23
    %v546 = vsub.s32 %v545, 127
    %v547 = vand.u32 2147483647, %v437
    %v548 = vand.u32 %v547, 8388607
    %v549 = vor.u32 %v548, 8388608
    %v550 = vsub.s32 0, %v549
    %v551 = vadd.s32 %v546, 1
    %vm552 = vcmp.gt.s32.totalorder %v551, 0
    %v553 = vsel %vm552, %v551, 0
    %v554 = vshrl.u32 %v553, 5
    %v555 = vand.u32 %v553, 31
    %v556 = vsub.s32 32, %v555
    %v557 = vshrl.u32 683565275, %v556
    %v558 = vshll.u32 683565275, %v555
    %v559 = vshrl.u32 2475754826, %v556
    %v560 = vor.u32 %v558, %v559
    %v561 = vshll.u32 2475754826, %v555
    %v562 = vshrl.u32 2131351028, %v556
    %v563 = vor.u32 %v561, %v562
    %v564 = vshll.u32 2131351028, %v555
    %v565 = vshrl.u32 2102212464, %v556
    %v566 = vor.u32 %v564, %v565
    %v567 = vshll.u32 2102212464, %v555
    %v568 = vshrl.u32 920167782, %v556
    %v569 = vor.u32 %v567, %v568
    %v570 = vshll.u32 920167782, %v555
    %v571 = vshrl.u32 1326507024, %v556
    %v572 = vor.u32 %v570, %v571
    %vm573 = vcmp.lt.s32.totalorder %v554, 1
    %vm574 = vcmp.lt.s32.totalorder %v554, 2
    %vm575 = vcmp.lt.s32.totalorder %v554, 3
    %vm576 = vcmp.lt.s32.totalorder %v554, 4
    %v577 = vsel %vm573, %v557, %v560
    %v578 = vsel %vm576, %v566, 2102212464
    %v579 = vsel %vm575, %v563, %v578
    %v580 = vsel %vm574, %v577, %v579
    %v581 = vsel %vm573, %v560, %v563
    %v582 = vsel %vm576, %v569, 920167782
    %v583 = vsel %vm575, %v566, %v582
    %v584 = vsel %vm574, %v581, %v583
    %v585 = vsel %vm573, %v563, %v566
    %v586 = vsel %vm576, %v572, 1326507024
    %v587 = vsel %vm575, %v569, %v586
    %v588 = vsel %vm574, %v585, %v587
    %v589 = vshll.u32 %v549, 8
    %v590 = vmul.u32.u64.compose %v589, %v588
    %v591 = vextract.low.u32 %v590
    %v592 = vextract.high.u32 %v590
    %v593 = vmul.u32.u64.compose %v589, %v584
    %v594 = vextract.low.u32 %v593
    %v595 = vextract.high.u32 %v593
    %v596 = vmul.u32 %v589, %v580
    %v597 = vadd.s32 %v592, %v594
    %vm598 = vc.u32 %v592, %v594
    %v599 = vadd.s32 %v595, 1
    %v600 = vsel %vm598, %v599, %v595
    %v601 = vadd.s32 %v596, %v600
    %v602 = vadd.s32 %v601, 536870912
    %v603 = vshrl.u32 %v602, 30
    %v604 = vshll.u32 %v603, 30
    %v605 = vsub.s32 %v601, %v604
    %vm606 = vcmp.lt.s32.totalorder %v605, 0
    %v607 = vsub.s32 0, %v605
    %v608 = vsel %vm606, %v607, %v605
    %v609 = vclz %v608
    %v610 = vsub.s32 %v609, 2
    %vm611 = vcmp.gt.s32.totalorder 0, %v610
    %v612 = vsel %vm611, 0, %v610
    %v613 = vsub.s32 32, %v612
    %v614 = vshll.u32 %v605, %v612
    %v615 = vshrl.u32 %v597, %v613
    %v616 = vor.u32 %v614, %v615
    %v617 = vsub.s32 4294967266, %v612
    %v618 = vadd.s32 %v617, 127
    %v619 = vshll.u32 %v618, 23
    %v620 = vor.u32 4788187, %v619
    %v621 = vand.u32 2147483647, %v620
    %v623 = vcvt.s32.f32 %v616
    %v624 = vmul.f32 %v623, %v621
    %v625 = vxor.u32 %v624, 2147483648
    %v626 = vsel %vm543, %v625, %v624
    %v627 = vsub.s32 4, %v603
    %v628 = vsel %vm543, %v627, %v603
    %v629 = vsel %vm542, %v437, %v626
    %v630 = vsel %vm542, 0, %v628
    %v631 = vcosq.f32.pop %v629
    %v632 = vsinq.f32.pop %v629
    %vm633 = vweird.f32 %v437
    %v634 = vadd.s32 %v630, 3
    %v635 = vand.u32 %v634, 3
    %vm636 = vcmp.lt.s32.totalorder %v635, 2
    %vm637 = vcmp.eq.s32.totalorder %v635, 0
    %v638 = vxor.u32 %v632, 2147483648
    %v639 = vsel %vm637, %v631, %v638
    %vm640 = vcmp.eq.s32.totalorder %v635, 2
    %v641 = vxor.u32 %v631, 2147483648
    %v642 = vsel %vm640, %v641, %v632
    %v643 = vsel %vm636, %v639, %v642
    %v644 = vsel %vm633, nan, %v643
    %v645 = vmul.f32 %v540, %v436
    %v646 = vmul.f32 %v644, %v436
    %v647 = vmul.f32 %v540, %v332
    %v648 = vmul.f32 %v644, %v124
    %v649 = vmul.f32 %v645, %v228
    %v650 = vadd.f32 %v648, %v649
    %v651 = vmul.f32 %v644, %v228
    %v652 = vmul.f32 %v645, %v124
    %v653 = vsub.f32 %v651, %v652
    %v654 = vsub.f32 0.0, %v644
    %v655 = vmul.f32 %v654, %v332
    %v656 = vmul.f32 %v540, %v124
    %v657 = vmul.f32 %v646, %v228
    %v658 = vsub.f32 %v656, %v657
    %v659 = vmul.f32 %v540, %v228
    %v660 = vmul.f32 %v646, %v124
    %v661 = vadd.f32 %v659, %v660
    %v662 = vsub.f32 0.0, %v332
    %v663 = vmul.f32 %v662, %v228
    %v664 = vmul.f32 %v332, %v124
    %v666 = vrot.slane %v650, 7
    %v669 = vrot.slane %v653, 6
    %v672 = vrot.slane %v655, 5
    %v675 = vrot.slane %v658, 4
    %v678 = vrot.slane %v661, 3
    %v681 = vrot.slane %v436, 2
    %v684 = vrot.slane %v663, 1
    %vm686 = vcmask 1040384
    %v687 = vsel %vm686, %v647, %v666
    %vm688 = vcmask 1041408
    %v689 = vsel %vm688, %v687, %v669
    %vm690 = vcmask 1042432
    %v691 = vsel %vm690, %v689, %v672
    %vm692 = vcmask 1043456
    %v693 = vsel %vm692, %v691, %v675
    %vm694 = vcmask 1044480
    %v695 = vsel %vm694, %v693, %v678
    %vm696 = vcmask 1045504
    %v697 = vsel %vm696, %v695, %v681
    %vm698 = vcmask 1046528
    %v699 = vsel %vm698, %v697, %v684
    %700 = vst [vmem:[#allocation5] sm:$0xff] %v699
    %701 = vst [vmem:[#allocation5 + $0x8] sm:$0x1] %v664
    // Predicated region
    $region10: #{tpu_custom_call.1} parent=1 // pred_check
      _
    $region11: #{tpu_custom_call.1} parent=1 // pred_check_branch
      %703 = sbr.rel (0) target = $region13
    $region12: #{tpu_custom_call.1} parent=1 // pred_region
      %s705 = ssub.s32 256, 256
      %706 = vsyncadd [#allocation4], %s705
      %s707 = sshll.u32 [#allocation5], 4
      %s708 = int_to_ptr.vmem [resolvable:$true] %s707
      %713 = dma.vmem_to_hbm [thread:$0]  %s708, 256, %s1, [#allocation4], 128, 128, 8
    $region13: #{tpu_custom_call.1} parent=1 // pred_fallthru
      _
    // Predicated region
    $region14: #{tpu_custom_call.1} parent=1 // pred_check
      _
    $region15: #{tpu_custom_call.1} parent=1 // pred_check_branch
      %715 = sbr.rel (0) target = $region17
    $region16: #{tpu_custom_call.1} parent=1 // pred_region
      %716 = dma.done [#allocation4], 256
    $region17: #{tpu_custom_call.1} parent=1 // pred_fallthru
      _
    %717 = vsyncpa [#allocation3], 1
    %718 = vsyncpa [#allocation4], 1

</llo_original>
